<compile_context>
chip_gen: v5e
topology: v5e:2x2
jax: 0.10.0
libtpu: 0.0.40
codegen_flags: <defaults>
</compile_context>

<pallas_src>
import functools

import jax
import jax.numpy as jnp
from jax.experimental import pallas as pl
from jax.experimental.pallas import tpu as pltpu


# ----------------------------------------------------------------------------- 
# Kernel: per entity tile, logits = qW @ ent_tile + qb ; out = sigmoid(logits)
#   qw_ref : (bsz, D)       query folded through the decompress weight (stream dtype)
#   qb_ref : (bsz, 1)       query folded through the decompress bias (f32)
#   ent_ref: (D, tile_e)    pre-transposed entity embedding tile (stream dtype)
#   out_ref: (bsz, tile_e)  probabilities (f32)
# -----------------------------------------------------------------------------
def _score_kernel(qw_ref, qb_ref, ent_ref, out_ref):
    logits = jnp.dot(qw_ref[...], ent_ref[...],
                     preferred_element_type=jnp.float32)   # f32 accumulation
    out_ref[...] = jax.nn.sigmoid(logits + qb_ref[...]).astype(out_ref.dtype)


def _fold_bn(gamma, beta, mean, var, eps=1e-5):
    scale = gamma / jnp.sqrt(var + eps)
    shift = beta - mean * scale
    return scale, shift


def _round_up(x, m):
    return (x + m - 1) // m * m


def _choose_tile_e(num_entities, emb_dim, stream_dtype,
                   target_tile_bytes=4 * 1024 * 1024):
    """Pick an entity tile size: ~target bytes per step, multiple of 128 lanes,
    clamped so the grid has at least 2 steps (both v7x TensorCores get work)
    and tiny entity tables don't pad up."""
    itemsize = jnp.dtype(stream_dtype).itemsize
    tile = max(128, (target_tile_bytes // (emb_dim * itemsize)) // 128 * 128)
    cap = max(128, _round_up(pl.cdiv(num_entities, 2), 128))
    return min(tile, cap)


def prepare_entity_stream(emb_e, *, stream_dtype=jnp.bfloat16,
                          target_tile_bytes=4 * 1024 * 1024):
    """One-time (per model) preparation of the streamed entity table.

    Returns the (D, E_pad) transposed / padded / cast copy of emb_e plus the
    static tile_e to use.  Doing this OUTSIDE the jitted forward removes the
    extra full read+write pass over the table that a per-call pad/cast costs.
    """
    E, D = emb_e.shape
    tile_e = _choose_tile_e(E, D, stream_dtype, target_tile_bytes)
    e_pad = _round_up(E, tile_e)
    ent_t = emb_e.T.astype(stream_dtype)                   # (D, E), lane-dense
    if e_pad != E:
        # Zero padding: padded columns produce sigmoid(qb), sliced off below.
        ent_t = jnp.pad(ent_t, ((0, 0), (0, e_pad - E)))
    return jax.block_until_ready(ent_t), tile_e


@functools.partial(jax.jit, static_argnames=("tile_e",))
def lendecom_distmult_forward(e1_idx, rel_idx, params, ent_t, *, tile_e):
    """Eval-mode forward. `ent_t` is the prepared (D, E_pad) streaming copy of
    emb_e from `prepare_entity_stream` (dtype = streaming dtype)."""
    emb_e = params["emb_e"]          # (E, D) f32 model weights (used for gather)
    emb_rel = params["emb_rel"]      # (R, L)
    w_dec = params["w_dec"]          # (L, D)  torch Linear layout (out, in)

    E, D = emb_e.shape
    D_t, e_pad = ent_t.shape
    assert D_t == D and e_pad % tile_e == 0
    stream_dtype = ent_t.dtype

    # --- tiny glue handled by XLA: gathers, BN folding, query computation ---
    e1_emb = emb_e[e1_idx]           # (bsz, D)
    rel_emb = emb_rel[rel_idx]       # (bsz, L)
    bsz = e1_emb.shape[0]

    s0, c0 = _fold_bn(params["bn0_g"], params["bn0_b"],
                      params["bn0_m"], params["bn0_v"])
    s1, c1 = _fold_bn(params["bn1_g"], params["bn1_b"],
                      params["bn1_m"], params["bn1_v"])
    s2, c2 = _fold_bn(params["bn2_g"], params["bn2_b"],
                      params["bn2_m"], params["bn2_v"])

    wt = w_dec.T                                             # (D, L)
    w_fold = (s0[:, None] * wt) * s1[None, :]                # (D, L)
    bias = (c0 @ wt) * s1 + c1                               # (L,)

    # q = bn1(decompress(bn0(e1))) * bn2(rel)                 (bsz, L)
    e1d = e1_emb @ w_fold + bias[None, :]
    reln = rel_emb * s2[None, :] + c2[None, :]
    q = e1d * reln

    # Fuse per-entity decompress into the query (exact algebraic rewrite):
    #   q @ (ent @ W_fold + bias).T == (q @ W_fold.T) @ ent.T + q @ bias
    qw = (q @ w_fold.T).astype(stream_dtype)                 # (bsz, D)
    qb = (q @ bias)[:, None]                                 # (bsz, 1) f32

    n_tiles = e_pad // tile_e

    grid_spec = pltpu.PrefetchScalarGridSpec(
        num_scalar_prefetch=0,
        grid=(n_tiles,),
        in_specs=[
            pl.BlockSpec((bsz, D), lambda i: (0, 0)),        # qW (replicated)
            pl.BlockSpec((bsz, 1), lambda i: (0, 0)),        # qb (replicated)
            pl.BlockSpec((D, tile_e), lambda i: (0, i)),     # entity tile (D, tile_e)
        ],
        out_specs=pl.BlockSpec((bsz, tile_e), lambda i: (0, i)),
    )

    out = pl.pallas_call(
        _score_kernel,
        out_shape=jax.ShapeDtypeStruct((bsz, e_pad), jnp.float32),
        grid_spec=grid_spec,
        compiler_params=pltpu.CompilerParams(
            dimension_semantics=("parallel",),     # no carry -> shard across TCs
            vmem_limit_bytes=32 * 1024 * 1024),    # safe on v5e/v6e/v7x for ~9 MB use
    )(qw, qb, ent_t)

    # TODO(synk): if bsz ever approaches D, tile bsz in the grid (reuse each
    # entity tile across bsz tiles) so output writeback doesn't rival the read.
    return out[:, :E]


# ----------------------------------------------------------------------------- 
# Plain-JAX reference matching the PyTorch forward (eval mode).
# -----------------------------------------------------------------------------
def _reference_forward(e1_idx, rel_idx, params):
    emb_e, emb_rel, w_dec = params["emb_e"], params["emb_rel"], params["w_dec"]
    s0, c0 = _fold_bn(params["bn0_g"], params["bn0_b"],
                      params["bn0_m"], params["bn0_v"])
    s1, c1 = _fold_bn(params["bn1_g"], params["bn1_b"],
                      params["bn1_m"], params["bn1_v"])
    s2, c2 = _fold_bn(params["bn2_g"], params["bn2_b"],
                      params["bn2_m"], params["bn2_v"])

    e1n = emb_e[e1_idx] * s0 + c0
    reln = emb_rel[rel_idx] * s2 + c2
    e1d = (e1n @ w_dec.T) * s1 + c1
    e2n = emb_e * s0 + c0
    e2d = (e2n @ w_dec.T) * s1 + c1
    return jax.nn.sigmoid((e1d * reln) @ e2d.T)


def _make_params(key, num_entities, num_relations, embedding_dim, lde_size):
    ks = jax.random.split(key, 9)
    xavier = lambda k, shape: jax.random.normal(k, shape, jnp.float32) * jnp.sqrt(
        2.0 / (shape[0] + shape[1]))
    emb_e = xavier(ks[0], (num_entities, embedding_dim)).at[0].set(0.0)   # padding_idx=0
    emb_rel = xavier(ks[1], (num_relations, lde_size)).at[0].set(0.0)     # padding_idx=0
    w_dec = xavier(ks[2], (lde_size, embedding_dim))                      # Linear(D->L), no bias

    def bn(k, n):
        k1, k2, k3, k4 = jax.random.split(k, 4)
        return dict(
            g=jax.random.uniform(k1, (n,), jnp.float32, 0.5, 1.5),
            b=jax.random.uniform(k2, (n,), jnp.float32, -0.1, 0.1),
            m=jax.random.uniform(k3, (n,), jnp.float32, -0.1, 0.1),
            v=jax.random.uniform(k4, (n,), jnp.float32, 0.5, 1.5),
        )

    bn0 = bn(ks[3], embedding_dim)
    bn1 = bn(ks[4], lde_size)
    bn2 = bn(ks[5], lde_size)

    params = dict(emb_e=emb_e, emb_rel=emb_rel, w_dec=w_dec)
    for name, d in (("bn0", bn0), ("bn1", bn1), ("bn2", bn2)):
        for k, v in d.items():
            params[f"{name}_{k}"] = v
    return params


if __name__ == "__main__":
    NUM_ENTITIES = 256      # num_entities
    NUM_RELATIONS = 24      # num_relations
    EMBEDDING_DIM = 32      # Config.embedding_dim (small)
    LDE_SIZE = 400          # self.lde_size (as in the module)
    BSZ = 2

    key = jax.random.PRNGKey(0)
    kp, ke, kr = jax.random.split(key, 3)
    params = _make_params(kp, NUM_ENTITIES, NUM_RELATIONS, EMBEDDING_DIM, LDE_SIZE)

    e1 = jax.random.randint(ke, (BSZ,), 0, NUM_ENTITIES, dtype=jnp.int32)
    rel = jax.random.randint(kr, (BSZ,), 0, NUM_RELATIONS, dtype=jnp.int32)

    # TODO(synk): dropout layers (inp_drop / hidden_drop) are training-only
    # (identity in eval) and are not implemented in the kernel.
    ref = _reference_forward(e1, rel, params)

    # --- f32 streaming path: tight check against the f32 reference ---
    ent_f32, tile_f32 = prepare_entity_stream(params["emb_e"],
                                              stream_dtype=jnp.float32)
    pred_f32 = jax.block_until_ready(
        lendecom_distmult_forward(e1, rel, params, ent_f32, tile_e=tile_f32))
    assert pred_f32.shape == (BSZ, NUM_ENTITIES)
    assert jnp.allclose(pred_f32, ref, atol=2e-5, rtol=1e-4), "f32 mismatch vs reference"

    # --- bf16 streaming path (default: halves the dominant HBM traffic) ---
    ent_bf16, tile_bf16 = prepare_entity_stream(params["emb_e"],
                                                stream_dtype=jnp.bfloat16)
    pred = jax.block_until_ready(
        lendecom_distmult_forward(e1, rel, params, ent_bf16, tile_e=tile_bf16))
    assert pred.shape == (BSZ, NUM_ENTITIES)
    # bf16 streaming of emb_e/qW -> loosen tolerance (f32 accumulation kept).
    assert jnp.allclose(pred, ref, atol=2e-2, rtol=2e-2), "bf16 mismatch vs reference"

    print("KERNEL_OK")
</pallas_src>

<mosaic_0001>
module attributes {stable_mosaic.version = 11 : i64} {
  func.func @_score_kernel(%arg0: i32, %arg1: memref<2x32xf32, #tpu.memory_space<vmem>>, %arg2: memref<2x1xf32, #tpu.memory_space<vmem>>, %arg3: memref<32x128xf32, #tpu.memory_space<vmem>>, %arg4: memref<2x128xf32, #tpu.memory_space<vmem>>) attributes {dimension_semantics = [#tpu.dimension_semantics<parallel>], iteration_bounds = array<i64: 2>, scalar_prefetch = 0 : i64, scratch_operands = 0 : i64, tpu.core_type = #tpu.core_type<tc>, window_params = [{pipeline_mode = #tpu.pipeline_mode<synchronous>, transform_indices = @transform_0, window_bounds = array<i64: 2, 32>}, {pipeline_mode = #tpu.pipeline_mode<synchronous>, transform_indices = @transform_1, window_bounds = array<i64: 2, 1>}, {transform_indices = @transform_2, window_bounds = array<i64: 32, 128>}, {transform_indices = @transform_3, window_bounds = array<i64: 2, 128>}]} {
    %c0 = arith.constant 0 : index
    %c0_0 = arith.constant 0 : index
    %0 = vector.load %arg1[%c0, %c0_0] : memref<2x32xf32, #tpu.memory_space<vmem>>, vector<2x32xf32>
    %c0_1 = arith.constant 0 : index
    %c0_2 = arith.constant 0 : index
    %1 = vector.load %arg3[%c0_1, %c0_2] : memref<32x128xf32, #tpu.memory_space<vmem>>, vector<32x128xf32>
    %cst = arith.constant dense<0.000000e+00> : vector<2x128xf32>
    %2 = tpu.matmul %0, %1, %cst {dimension_numbers = #tpu.dot_dimension_numbers<[1], [0], [0], [1], [0, 0, 1, 1], [], []>} : vector<2x32xf32>, vector<32x128xf32>, vector<2x128xf32> -> vector<2x128xf32>
    %c0_3 = arith.constant 0 : index
    %c0_4 = arith.constant 0 : index
    %3 = vector.load %arg2[%c0_3, %c0_4] : memref<2x1xf32, #tpu.memory_space<vmem>>, vector<2x1xf32>
    %4 = vector.broadcast %3 : vector<2x1xf32> to vector<2x128xf32>
    %5 = arith.addf %2, %4 : vector<2x128xf32>
    %6 = arith.negf %5 : vector<2x128xf32>
    %7 = math.exp %6 : vector<2x128xf32>
    %cst_5 = arith.constant 1.000000e+00 : f32
    %8 = vector.broadcast %cst_5 : f32 to vector<2x128xf32>
    %9 = arith.addf %8, %7 : vector<2x128xf32>
    %10 = arith.divf %8, %9 : vector<2x128xf32>
    %c0_6 = arith.constant 0 : index
    %c0_7 = arith.constant 0 : index
    %11 = vector.load %arg4[%c0_6, %c0_7] : memref<2x128xf32, #tpu.memory_space<vmem>>, vector<2x128xf32>
    tpu.vector_store %arg4[%c0_6, %c0_7], %10 {strides = array<i32>} : memref<2x128xf32, #tpu.memory_space<vmem>>, vector<2x128xf32>,
    return
  }
  func.func @transform_0(%arg0: i32) -> (i32, i32) {
    %c0_i32 = arith.constant 0 : i32
    %c0_i32_0 = arith.constant 0 : i32
    %c0_i32_1 = arith.constant 0 : i32
    return %c0_i32, %c0_i32_0 : i32, i32
  }
  func.func @transform_1(%arg0: i32) -> (i32, i32) {
    %c0_i32 = arith.constant 0 : i32
    %c0_i32_0 = arith.constant 0 : i32
    %c0_i32_1 = arith.constant 0 : i32
    return %c0_i32, %c0_i32_0 : i32, i32
  }
  func.func @transform_2(%arg0: i32) -> (i32, i32) {
    %c0_i32 = arith.constant 0 : i32
    %c0_i32_0 = arith.constant 0 : i32
    return %c0_i32, %arg0 : i32, i32
  }
  func.func @transform_3(%arg0: i32) -> (i32, i32) {
    %c0_i32 = arith.constant 0 : i32
    %c0_i32_0 = arith.constant 0 : i32
    return %c0_i32, %arg0 : i32, i32
  }
}

</mosaic_0001>

<llo_original>
// kernel: lendecom_distmult_forward.1
$region0: #{lendecom_distmult_forward.1}
  #allocation0 [shape = 'u32[]', space=smem, size = 0x4, offset = 0x4, fixed_abs, tag = 'smem constant byte address 0x4 - core index']
  #allocation1 [shape = 'u32[72,128]{1,0:T(1,128)}', space=vmem, size = 0x9000, scoped, tag = 'internal scratch']
  %s0 = inlined_call_operand.vmem [shape: f32[2,32], index: 0, kind: input, shape index: {}]
  %s1 = inlined_call_operand.vmem [shape: f32[2,1], index: 1, kind: input, shape index: {}]
  %s2 = inlined_call_operand.vmem [shape: f32[32,256], index: 2, kind: input, shape index: {}]
  %s3 = inlined_call_operand.hbm [shape: f32[2,256], index: 3, kind: output, shape index: {}]
  %s4 = sld [smem:[#allocation0]]
  $region83: #{lendecom_distmult_forward.1} parent=0
    _
  %s6 = ssub.s32 1, %s4
  %s7 = scalar_select 0, %s6, %s4
  $region1: #{lendecom_distmult_forward.1} parent=0
    #allocation2 [shape = 'u8[32768]{0}', space=vmem, size = 0x8000, scoped, tag = 'input window, operand 2']
    #allocation3 [shape = 'u8[2048]{0}', space=vmem, size = 0x800, scoped, tag = 'output window, operand 0']
    #allocation4 [shape = 's32[2]{0}', space=sflag, size = 0x8, scoped, tag = 'scoped memory for lendecom_distmult_forward.1']
    %8 = vsyncpa [#allocation4], 0
    %s9 = scalar_lea.sflag [#allocation4], 1
    %10 = vsyncpa %s9, 0
    loop: start=0, step=1, limit=4
    $region2: #{lendecom_distmult_forward.1} parent=1 // loop_pre_header
      _
    $region3: #{lendecom_distmult_forward.1} parent=1 // loop_header
      %s12 = sphi 0, %s16
      %p13 = scmp.ge.s32.totalorder %s12, 4
      %s20 = sphi 0, %s20
      %s22 = sphi 0, %s20
      %s23 = sphi 0, %s22
      %s37 = sphi 0, %s23
      %s41 = sphi 0, %s41
      %s43 = sphi 0, %s41
      %s44 = sphi 0, %s43
      %s58 = sphi 0, %s44
      %s64 = sphi 0, %s66
      %s67 = sphi 0, %s64
      %s68 = sphi 0, %s67
      %s84 = sphi 0, %s68
      %s90 = sphi 0, %s92
      %s93 = sphi 0, %s90
      %s94 = sphi 0, %s93
      %s110 = sphi 0, %s94
    $region4: #{lendecom_distmult_forward.1} parent=1 // loop_header_branch
      %15 = sbr.rel (%p13) target = $region8
    $region5: #{lendecom_distmult_forward.1} parent=1 // loop_body
      %s17 = ssub.s32 %s12, 1
      %s18 = ssub.s32 %s12, 2
      %s19 = sadd.s32 %s12, 1
      %s21 = sadd.s32 %s20, 1
      %p24 = scmp.eq.s32.totalorder %s12, 1
      %p25 = scmp.ne.s32.totalorder %s20, %s22
      %p26 = scmp.eq.s32.totalorder %s12, 0
      %p27 = por %p25, %p26
      %p28 = scmp.ne.s32.totalorder %s20, %s22
      %p29 = scmp.eq.s32.totalorder %s17, 1
      %p30 = por %p28, %p29
      %p31 = scmp.ne.s32.totalorder %s22, %s23
      %p32 = scmp.eq.s32.totalorder %s17, 0
      %p33 = por %p31, %p32
      %p34 = scmp.ne.s32.totalorder %s22, %s23
      %p35 = scmp.eq.s32.totalorder %s18, 1
      %p36 = por %p34, %p35
      %p38 = scmp.ne.s32.totalorder %s23, %s37
      %p39 = scmp.eq.s32.totalorder %s18, 0
      %p40 = por %p38, %p39
      %s42 = sadd.s32 %s41, 1
      %p45 = scmp.eq.s32.totalorder %s12, 1
      %p46 = scmp.ne.s32.totalorder %s41, %s43
      %p47 = scmp.eq.s32.totalorder %s12, 0
      %p48 = por %p46, %p47
      %p49 = scmp.ne.s32.totalorder %s41, %s43
      %p50 = scmp.eq.s32.totalorder %s17, 1
      %p51 = por %p49, %p50
      %p52 = scmp.ne.s32.totalorder %s43, %s44
      %p53 = scmp.eq.s32.totalorder %s17, 0
      %p54 = por %p52, %p53
      %p55 = scmp.ne.s32.totalorder %s43, %s44
      %p56 = scmp.eq.s32.totalorder %s18, 1
      %p57 = por %p55, %p56
      %p59 = scmp.ne.s32.totalorder %s44, %s58
      %p60 = scmp.eq.s32.totalorder %s18, 0
      %p61 = por %p59, %p60
      %s62 = ssub.s32 %s12, %s19
      %p63 = scmp.eq.s32.totalorder %s62, 0
      %s65 = sadd.s32 %s64, 1
      %s66 = scalar_select %p63, %s64, %s65
      %p69 = pneg %p63
      %p70 = scmp.eq.s32.totalorder %s12, 1
      %p71 = por %p69, %p70
      %p72 = scmp.ne.s32.totalorder %s64, %s67
      %p73 = scmp.eq.s32.totalorder %s12, 0
      %p74 = por %p72, %p73
      %p75 = scmp.ne.s32.totalorder %s64, %s67
      %p76 = scmp.eq.s32.totalorder %s17, 1
      %p77 = por %p75, %p76
      %p78 = scmp.ne.s32.totalorder %s67, %s68
      %p79 = scmp.eq.s32.totalorder %s17, 0
      %p80 = por %p78, %p79
      %p81 = scmp.ne.s32.totalorder %s67, %s68
      %p82 = scmp.eq.s32.totalorder %s18, 1
      %p83 = por %p81, %p82
      %p85 = scmp.ne.s32.totalorder %s68, %s84
      %p86 = scmp.eq.s32.totalorder %s18, 0
      %p87 = por %p85, %p86
      %s88 = ssub.s32 %s12, %s19
      %p89 = scmp.eq.s32.totalorder %s88, 0
      %s91 = sadd.s32 %s90, 1
      %s92 = scalar_select %p89, %s90, %s91
      %p95 = pneg %p89
      %p96 = scmp.eq.s32.totalorder %s12, 1
      %p97 = por %p95, %p96
      %p98 = scmp.ne.s32.totalorder %s90, %s93
      %p99 = scmp.eq.s32.totalorder %s12, 0
      %p100 = por %p98, %p99
      %p101 = scmp.ne.s32.totalorder %s90, %s93
      %p102 = scmp.eq.s32.totalorder %s17, 1
      %p103 = por %p101, %p102
      %p104 = scmp.ne.s32.totalorder %s93, %s94
      %p105 = scmp.eq.s32.totalorder %s17, 0
      %p106 = por %p104, %p105
      %p107 = scmp.ne.s32.totalorder %s93, %s94
      %p108 = scmp.eq.s32.totalorder %s18, 1
      %p109 = por %p107, %p108
      %p111 = scmp.ne.s32.totalorder %s94, %s110
      %p112 = scmp.eq.s32.totalorder %s18, 0
      %p113 = por %p111, %p112
      %p114 = scmp.le.s32.totalorder 1, %s12
      %p115 = scmp.lt.s32.totalorder %s12, 3
      %p116 = pnand %p114, %p115
      %p117 = pneg %p116
      // Predicated region
      $region9: #{lendecom_distmult_forward.1} parent=5 // pred_check
        _
      $region10: #{lendecom_distmult_forward.1} parent=5 // pred_check_branch
        %119 = sbr.rel (%p116) target = $region12
      $region11: #{lendecom_distmult_forward.1} parent=5 // pred_region
        %s120 = ssub.s32 %s12, 1
        // Predicated region
        $region13: #{lendecom_distmult_forward.1} parent=11 // pred_check
          %p121 = pneg %p33
        $region14: #{lendecom_distmult_forward.1} parent=11 // pred_check_branch
          %123 = sbr.rel (%p121) target = $region16
        $region15: #{lendecom_distmult_forward.1} parent=11 // pred_region
          _
        $region16: #{lendecom_distmult_forward.1} parent=11 // pred_fallthru
          _
        // Predicated region
        $region17: #{lendecom_distmult_forward.1} parent=11 // pred_check
          %p124 = pneg %p54
        $region18: #{lendecom_distmult_forward.1} parent=11 // pred_check_branch
          %126 = sbr.rel (%p124) target = $region20
        $region19: #{lendecom_distmult_forward.1} parent=11 // pred_region
          _
        $region20: #{lendecom_distmult_forward.1} parent=11 // pred_fallthru
          _
      $region12: #{lendecom_distmult_forward.1} parent=5 // pred_fallthru
        _
      %p127 = scmp.lt.s32.totalorder %s12, 2
      // Predicated region
      $region21: #{lendecom_distmult_forward.1} parent=5 // pred_check
        %p128 = pneg %p127
      $region22: #{lendecom_distmult_forward.1} parent=5 // pred_check_branch
        %130 = sbr.rel (%p128) target = $region24
      $region23: #{lendecom_distmult_forward.1} parent=5 // pred_region
        // Predicated region
        $region25: #{lendecom_distmult_forward.1} parent=23 // pred_check
          %p131 = pneg %p74
        $region26: #{lendecom_distmult_forward.1} parent=23 // pred_check_branch
          %133 = sbr.rel (%p131) target = $region28
        $region27: #{lendecom_distmult_forward.1} parent=23 // pred_region
          %s134 = sand.u32 %s64, 1
          %s135 = sand.u32 %s64, 1
          %s136 = smul.addr %s135, 32
          %s137 = scalar_lea.vmem [#allocation2], %s136
          %s138 = smul.addr %s12, 8
          %s139 = scalar_lea.vmem %s2, %s138
          // Predicated region
          $region29: #{lendecom_distmult_forward.1} parent=27 // pred_check
            _
          $region30: #{lendecom_distmult_forward.1} parent=27 // pred_check_branch
            %141 = sbr.rel (0) target = $region32
          $region31: #{lendecom_distmult_forward.1} parent=27 // pred_region
            // Predicated region
            $region33: #{lendecom_distmult_forward.1} parent=31 // pred_check
              _
            $region34: #{lendecom_distmult_forward.1} parent=31 // pred_check_branch
              %143 = sbr.rel (0) target = $region36
            $region35: #{lendecom_distmult_forward.1} parent=31 // pred_region
              // Predicated region
              $region48: #{lendecom_distmult_forward.1} parent=35 // pred_check
                _
              $region49: #{lendecom_distmult_forward.1} parent=35 // pred_check_branch
                %165 = sbr.rel (0) target = $region51
              $region50: #{lendecom_distmult_forward.1} parent=35 // pred_region
                loop: start=0, step=1, limit=1
                $region52: #{lendecom_distmult_forward.1} parent=50 // loop_pre_header
                  _
                $region53: #{lendecom_distmult_forward.1} parent=50 // loop_header
                  %s167 = sphi 0, %s171
                  %p168 = scmp.ge.s32.totalorder %s167, 1
                  %s172 = sphi %s139, %s139
                  %s173 = sphi %s137, %s137
                $region54: #{lendecom_distmult_forward.1} parent=50 // loop_header_branch
                  %170 = sbr.rel (%p168) target = $region58
                $region55: #{lendecom_distmult_forward.1} parent=50 // loop_body
                  %v174 = vld [vmem:[%s172] sm:$0xff]
                  %175 = vst [vmem:[%s173] sm:$0xff] %v174
                  %v176 = vld [vmem:[%s172 + $0x10] sm:$0xff]
                  %177 = vst [vmem:[%s173 + $0x8] sm:$0xff] %v176
                  %v178 = vld [vmem:[%s172 + $0x20] sm:$0xff]
                  %179 = vst [vmem:[%s173 + $0x10] sm:$0xff] %v178
                  %v180 = vld [vmem:[%s172 + $0x30] sm:$0xff]
                  %181 = vst [vmem:[%s173 + $0x18] sm:$0xff] %v180
                $region56: #{lendecom_distmult_forward.1} parent=50 // loop_footer
                  %s171 = sadd.s32 1, %s167
                $region57: #{lendecom_distmult_forward.1} parent=50 // loop_footer_branch
                  %166 = sbr.rel target = $region53
                $region58: #{lendecom_distmult_forward.1} parent=50 // loop_exit
                  _
              $region51: #{lendecom_distmult_forward.1} parent=35 // pred_fallthru
                _
              // Predicated region
              $region59: #{lendecom_distmult_forward.1} parent=35 // pred_check
                _
              $region60: #{lendecom_distmult_forward.1} parent=35 // pred_check_branch
                %183 = sbr.rel target = $region62
              $region61: #{lendecom_distmult_forward.1} parent=35 // pred_region
                _
              $region62: #{lendecom_distmult_forward.1} parent=35 // pred_fallthru
                _
            $region36: #{lendecom_distmult_forward.1} parent=31 // pred_fallthru
              _
            // Predicated region
            $region37: #{lendecom_distmult_forward.1} parent=31 // pred_check
              _
            $region38: #{lendecom_distmult_forward.1} parent=31 // pred_check_branch
              %145 = sbr.rel target = $region40
            $region39: #{lendecom_distmult_forward.1} parent=31 // pred_region
              %s147 = ssub.s32 256, 1
              loop: start=0, step=1, limit=1
              $region41: #{lendecom_distmult_forward.1} parent=39 // loop_pre_header
                _
              $region42: #{lendecom_distmult_forward.1} parent=39 // loop_header
                %s149 = sphi 0, %s153
                %p150 = scmp.ge.s32.totalorder %s149, 1
                %s154 = sphi %s139, %s139
                %s155 = sphi %s137, %s137
              $region43: #{lendecom_distmult_forward.1} parent=39 // loop_header_branch
                %152 = sbr.rel (%p150) target = $region47
              $region44: #{lendecom_distmult_forward.1} parent=39 // loop_body
                %v156 = vld [vmem:[%s154] sm:%s147]
                %157 = vst [vmem:[%s155] sm:%s147] %v156
                %v158 = vld [vmem:[%s154 + $0x10] sm:%s147]
                %159 = vst [vmem:[%s155 + $0x8] sm:%s147] %v158
                %v160 = vld [vmem:[%s154 + $0x20] sm:%s147]
                %161 = vst [vmem:[%s155 + $0x10] sm:%s147] %v160
                %v162 = vld [vmem:[%s154 + $0x30] sm:%s147]
                %163 = vst [vmem:[%s155 + $0x18] sm:%s147] %v162
              $region45: #{lendecom_distmult_forward.1} parent=39 // loop_footer
                %s153 = sadd.s32 1, %s149
              $region46: #{lendecom_distmult_forward.1} parent=39 // loop_footer_branch
                %148 = sbr.rel target = $region42
              $region47: #{lendecom_distmult_forward.1} parent=39 // loop_exit
                _
            $region40: #{lendecom_distmult_forward.1} parent=31 // pred_fallthru
              _
          $region32: #{lendecom_distmult_forward.1} parent=27 // pred_fallthru
            _
          %184 = vnop
        $region28: #{lendecom_distmult_forward.1} parent=23 // pred_fallthru
          _
      $region24: #{lendecom_distmult_forward.1} parent=5 // pred_fallthru
        _
      %p185 = scmp.le.s32.totalorder 1, %s12
      %p186 = scmp.lt.s32.totalorder %s12, 3
      %p187 = pnand %p185, %p186
      %p188 = pneg %p187
      // Predicated region
      $region63: #{lendecom_distmult_forward.1} parent=5 // pred_check
        _
      $region64: #{lendecom_distmult_forward.1} parent=5 // pred_check_branch
        %190 = sbr.rel (%p187) target = $region66
      $region65: #{lendecom_distmult_forward.1} parent=5 // pred_region
        %s191 = ssub.s32 %s12, 1
        %s192 = sand.u32 %s67, 1
        %s193 = sand.u32 %s67, 1
        %s194 = smul.addr %s193, 32
        %s195 = scalar_lea.vmem [#allocation2], %s194
        // Predicated region
        $region67: #{lendecom_distmult_forward.1} parent=65 // pred_check
          %p196 = pneg %p80
        $region68: #{lendecom_distmult_forward.1} parent=65 // pred_check_branch
          %198 = sbr.rel (%p196) target = $region70
        $region69: #{lendecom_distmult_forward.1} parent=65 // pred_region
          _
        $region70: #{lendecom_distmult_forward.1} parent=65 // pred_fallthru
          _
        %p199 = pneg %p33
        %p200 = pneg %p30
        %p201 = pneg %p54
        %p202 = pneg %p51
        %s203 = sand.u32 %s67, 1
        %s204 = sand.u32 %s67, 1
        %s205 = smul.addr %s204, 32
        %s206 = scalar_lea.vmem [#allocation2], %s205
        %p207 = pneg %p80
        %p208 = pneg %p77
        %p209 = pneg %p106
        %p210 = pneg %p103
        %s211 = sand.u32 %s93, 1
        %s212 = scalar_lea.sflag [#allocation4], %s211
        %s213 = sand.u32 %s93, 1
        %s214 = smul.addr %s213, 2
        %s215 = scalar_lea.vmem [#allocation3], %s214
        %v216 = vld [vmem:[%s0] sm:$0x3]
        %v217 = vld [vmem:[%s195] sm:$0xff]
        %v218 = vld [vmem:[%s195 + $0x8] sm:$0xff]
        %v219 = vld [vmem:[%s195 + $0x10] sm:$0xff]
        %v220 = vld [vmem:[%s195 + $0x18] sm:$0xff]
        %v221 = vld [vmem:[%s1] sm:$0x3]
        %223 = vset.pattern.permute.xlu0 0
        %224 = vperm.xlu0 %223, %v221
        %v225 = vpop.permute.xlu0 %224
        %vm227 = vcmask 261120
        %v229 = vsel %vm227, %v216, 0
        %231 = vmatpush.msra.mxu0 0.0
        %232 = vmatpush.msra.mxu0 0.0
        %233 = vmatpush.msra.mxu0 0.0
        %234 = vmatpush.msra.mxu0 0.0
        %235 = vmatpush.msra.mxu0 0.0
        %236 = vmatpush.msra.mxu0 0.0
        %237 = vmatpush.msra.mxu0 0.0
        %238 = vmatpush.msra.mxu0 0.0
        %239 = vmatpush.msra.mxu0 0.0
        %240 = vmatpush.msra.mxu0 0.0
        %241 = vmatpush.msra.mxu0 0.0
        %242 = vmatpush.msra.mxu0 0.0
        %243 = vmatpush.msra.mxu0 %v220
        %244 = vmatpush.msra.mxu0 %v219
        %245 = vmatpush.msra.mxu0 %v218
        %246 = vmatpush.msra.mxu0 %v217
        %247 = vmatmul.f32.gmra.mxu0 %v229
        %v248 = vpop.f32.mrf.mxu0
        %v249 = vadd.f32 %v225, %v248
        %250 = vdwg.mxu0
        %v251 = vxor.u32 %v249, 2147483648
        %v252 = vmul.f32 %v251, 1.442695
        %v253 = vpow.pop %v252
        %v254 = vadd.f32 %v253, 1.0
        %v255 = vrcp.pop %v254
        %v256 = vmul.f32 %v254, %v255
        %v257 = vsub.f32 1.0, %v256
        %v258 = vmul.f32 %v255, %v257
        %v259 = vadd.f32 %v255, %v258
        %vm260 = vweird.f32 %v254
        %vm261 = vweird.f32 %v255
        %vm262 = vmor %vm260, %vm261
        %v263 = vsel %vm262, %v255, %v259
        %v264 = vand.u32 2147483647, %v254
        %vm265 = vcmp.eq.f32.partialorder %v264, 8.507059e+37
        %v266 = vand.u32 %v254, 2147483648
        %v267 = vor.u32 1.1754944e-38, %v266
        %v268 = vsel %vm265, %v267, %v263
        %v269 = vmul.f32 1.0, %v268
        %270 = vst [vmem:[%s215] sm:$0x3] %v269
        %s271 = sand.u32 %s93, 1
        %s272 = scalar_lea.sflag [#allocation4], %s271
        %s273 = sand.u32 %s93, 1
        %s274 = smul.addr %s273, 2
        %s275 = scalar_lea.vmem [#allocation3], %s274
        // Predicated region
        $region71: #{lendecom_distmult_forward.1} parent=65 // pred_check
          %p276 = pneg %p103
        $region72: #{lendecom_distmult_forward.1} parent=65 // pred_check_branch
          %278 = sbr.rel (%p276) target = $region74
        $region73: #{lendecom_distmult_forward.1} parent=65 // pred_region
          %280 = vsyncadd %s272, 0
          %s281 = smul.addr %s17, 2
          %s282 = scalar_lea.hbm %s3, %s281
          %s284 = sshll.u32 %s275, 4
          %s285 = int_to_ptr.vmem [resolvable:$true] %s284
          %s286 = sshll.u32 %s282, 4
          %s287 = int_to_ptr.hbm [resolvable:$true] %s286
          %289 = dma.vmem_to_hbm [thread:$0]  %s285, 32, %s287, %s272
        $region74: #{lendecom_distmult_forward.1} parent=65 // pred_fallthru
          _
      $region66: #{lendecom_distmult_forward.1} parent=5 // pred_fallthru
        _
      %p290 = scmp.le.s32.totalorder 2, %s12
      // Predicated region
      $region75: #{lendecom_distmult_forward.1} parent=5 // pred_check
        %p291 = pneg %p290
      $region76: #{lendecom_distmult_forward.1} parent=5 // pred_check_branch
        %293 = sbr.rel (%p291) target = $region78
      $region77: #{lendecom_distmult_forward.1} parent=5 // pred_region
        %s294 = ssub.s32 %s12, 2
        // Predicated region
        $region79: #{lendecom_distmult_forward.1} parent=77 // pred_check
          %p295 = pneg %p109
        $region80: #{lendecom_distmult_forward.1} parent=77 // pred_check_branch
          %297 = sbr.rel (%p295) target = $region82
        $region81: #{lendecom_distmult_forward.1} parent=77 // pred_region
          %s298 = sand.u32 %s94, 1
          %s299 = scalar_lea.sflag [#allocation4], %s298
          %s300 = sand.u32 %s94, 1
          %s301 = smul.addr %s300, 2
          %s302 = scalar_lea.vmem [#allocation3], %s301
          %304 = dma.done %s299, 32
        $region82: #{lendecom_distmult_forward.1} parent=77 // pred_fallthru
          _
      $region78: #{lendecom_distmult_forward.1} parent=5 // pred_fallthru
        _
    $region6: #{lendecom_distmult_forward.1} parent=1 // loop_footer
      %s16 = sadd.s32 1, %s12
    $region7: #{lendecom_distmult_forward.1} parent=1 // loop_footer_branch
      %11 = sbr.rel target = $region3
    $region8: #{lendecom_distmult_forward.1} parent=1 // loop_exit
      _
    %305 = vsyncpa [#allocation4], 1
    %s306 = scalar_lea.sflag [#allocation4], 1
    %307 = vsyncpa %s306, 1

</llo_original>
